<compile_context>
chip_gen: v5e
topology: v5e:2x2
jax: 0.10.0
libtpu: 0.0.40
codegen_flags: <defaults>
</compile_context>

<pallas_src>
import functools

import jax
import jax.numpy as jnp
from jax.experimental import pallas as pl
from jax.experimental.pallas import tpu as pltpu

EPS = 1e-5
NEG_SLOPE = 0.01          # torch nn.LeakyReLU default


def _round_up(v, m):
    return (v + m - 1) // m * m


def _vmem_capacity_bytes():
    """Physical VMEM of the current generation (fallback: v7x's 64 MiB)."""
    try:
        return int(pltpu.get_tpu_info().vmem_capacity_bytes)
    except Exception:
        return 64 << 20


def _vmem_bytes(tm, dp, hp, x_itemsize, out_itemsize):
    # double-buffered bf16 x tile + (possibly double-buffered) bf16 weight +
    # double-buffered output tile + live (TM,Hp) f32 intermediates (y and
    # y*y / z) + stats / scale / shift rows + compiler-scratch headroom.
    return (2 * tm * dp * x_itemsize
            + 2 * hp * dp * 2
            + 2 * tm * hp * out_itemsize
            + 2 * tm * hp * 4
            + 8 * hp * 4
            + (2 << 20))


def _stats_kernel(x_ref, w_ref, sum_ref, sumsq_ref):
    # x_ref: (TM, Dp) bf16, w_ref: (Dp, Hp) bf16 -> per-channel partial stats of xW.
    y = jnp.dot(x_ref[...], w_ref[...],
                preferred_element_type=jnp.float32)               # (TM, Hp) f32
    # Token-axis reduction via a ones-vector matmul (MXU) instead of an XLU sum.
    ones = jnp.ones((1, y.shape[0]), jnp.float32)                 # (1, TM)
    sum_ref[0] = jnp.dot(ones, y, preferred_element_type=jnp.float32)
    sumsq_ref[0] = jnp.dot(ones, y * y, preferred_element_type=jnp.float32)


def _apply_kernel(x_ref, w_ref, scale_ref, shift_ref, o_ref):
    # out = leaky_relu((xW) * scale + shift); BN affine + linear bias are folded
    # into (scale, shift) outside the kernel.
    y = jnp.dot(x_ref[...], w_ref[...],
                preferred_element_type=jnp.float32)               # (TM, Hp) f32
    z = y * scale_ref[...] + shift_ref[...]
    o_ref[...] = jnp.maximum(z, NEG_SLOPE * z).astype(o_ref.dtype)


@functools.partial(jax.jit, static_argnames=("eps", "tm"))
def dense_block_forward(x, weight, bias, gamma, beta, *, eps=EPS, tm=None):
    """x: (B, S, D).  weight: (H, D), bias/gamma/beta: (H,).  Returns (B, S, H)."""
    del bias  # the Linear bias cancels analytically inside training-mode BN
    B, S, D = x.shape
    H = weight.shape[0]
    N = B * S
    out_dtype = x.dtype

    Dp = _round_up(D, 128)          # lane-dense contraction dim
    Hp = _round_up(H, 128)          # lane-dense output dim (no masked stores)

    # ---- generation-aware VMEM budget / tile sizing --------------------------
    cap = _vmem_capacity_bytes()
    if cap >= (96 << 20):           # v5e / v6e: 128 MiB physical VMEM
        budget, vlim_cap, tm_cap = 80 << 20, 96 << 20, 2048
    else:                           # v7x: 64 MiB physical VMEM per TensorCore
        budget, vlim_cap, tm_cap = 28 << 20, 52 << 20, 512

    x_isz = 2                       # x is cast to bf16 at pad time
    o_isz = jnp.dtype(out_dtype).itemsize

    if tm is None:
        tm = min(tm_cap, _round_up(N, 8))
        # Keep at least 2 grid steps so the "parallel" axis can feed both
        # v7x TensorCores (harmless on single-TC v5e/v6e).
        if N > 8:
            tm = min(tm, max(8, _round_up(pl.cdiv(N, 2), 8)))
    tm = max(8, _round_up(tm, 8))
    while tm > 8 and _vmem_bytes(tm, Dp, Hp, x_isz, o_isz) > budget:
        tm = max(8, _round_up(tm // 2, 8))
    Np = _round_up(N, tm)
    grid = (Np // tm,)

    # ---- host-side prep -------------------------------------------------------
    # x -> bf16 at pad time (halves x HBM traffic / VMEM across both passes).
    # Weight pre-transposed to (Dp, Hp) so the MXU RHS already has its
    # contraction dim on the sublane axis (no per-step XLU transpose).
    # TODO(synk): in a real model, cache the padded/transposed bf16 weight
    # across calls instead of re-padding/casting every forward.
    x_p = jnp.pad(x.reshape(N, D), ((0, Np - N), (0, Dp - D))).astype(jnp.bfloat16)
    w_t = jnp.pad(weight, ((0, Hp - H), (0, Dp - D))).T.astype(jnp.bfloat16)  # (Dp, Hp)
    gamma_p = jnp.pad(gamma, (0, Hp - H)).astype(jnp.float32)   # padded chans -> 0
    beta_p = jnp.pad(beta, (0, Hp - H)).astype(jnp.float32)

    vlim = int(min(max(_vmem_bytes(tm, Dp, Hp, x_isz, o_isz), 32 << 20), vlim_cap))
    cparams = pltpu.CompilerParams(dimension_semantics=("parallel",),
                                   vmem_limit_bytes=vlim)

    x_spec = pl.BlockSpec((tm, Dp), lambda i: (i, 0))
    w_spec = pl.BlockSpec((Dp, Hp), lambda i: (0, 0))     # resident across tiles
    stat_spec = pl.BlockSpec((1, 1, Hp), lambda i: (i, 0, 0))

    # ---- pass 1: per-tile partial BN statistics of xW -------------------------
    sums, sumsqs = pl.pallas_call(
        _stats_kernel,
        grid=grid,
        in_specs=[x_spec, w_spec],
        out_specs=(stat_spec, stat_spec),
        out_shape=(jax.ShapeDtypeStruct((grid[0], 1, Hp), jnp.float32),
                   jax.ShapeDtypeStruct((grid[0], 1, Hp), jnp.float32)),
        compiler_params=cparams,
    )(x_p, w_t)

    # ---- glue: fold BN (training-mode batch stats, biased var) into a single
    # per-channel scale/shift.  y = xW + b => mean_y = mean_xw + b, so the bias
    # cancels: shift = beta - mean_xw * scale.  All (H,)-sized, negligible.
    psum = jnp.sum(sums[:, 0, :], axis=0)
    psumsq = jnp.sum(sumsqs[:, 0, :], axis=0)
    mean_xw = psum / N
    var = jnp.maximum(psumsq / N - mean_xw * mean_xw, 0.0)
    scale = gamma_p * jax.lax.rsqrt(var + eps)
    shift = beta_p - mean_xw * scale

    # ---- pass 2: normalize + LeakyReLU (matmul recompute; cheaper in HBM
    # traffic than round-tripping the f32 activation for typical D) ------------
    # TODO(synk): on v5e with D >= ~512, store y as bf16 in pass 1 and make this
    # a pure scale/shift/LeakyReLU pass instead of recomputing the matmul.
    out_p = pl.pallas_call(
        _apply_kernel,
        grid=grid,
        in_specs=[x_spec, w_spec,
                  pl.BlockSpec((1, Hp), lambda i: (0, 0)),
                  pl.BlockSpec((1, Hp), lambda i: (0, 0))],
        out_specs=pl.BlockSpec((tm, Hp), lambda i: (i, 0)),
        out_shape=jax.ShapeDtypeStruct((Np, Hp), out_dtype),
        compiler_params=cparams,
    )(x_p, w_t, scale.reshape(1, Hp), shift.reshape(1, Hp))

    return out_p[:N, :H].reshape(B, S, H)


def reference_forward(x, weight, bias, gamma, beta):
    """Pure-JAX reference of the torch module (training-mode BN, eval dropout)."""
    y = jnp.einsum("bsd,hd->bsh", x, weight) + bias
    mean = jnp.mean(y, axis=(0, 1), keepdims=True)
    var = jnp.mean((y - mean) ** 2, axis=(0, 1), keepdims=True)
    y = gamma * (y - mean) / jnp.sqrt(var + EPS) + beta
    return jnp.where(y >= 0.0, y, NEG_SLOPE * y)


if __name__ == "__main__":
    # Small shapes; D=16, H=32 deliberately exercise the lane-padding path and
    # tm=32 gives a 3-tile grid (one tile partially padded).
    B, S, D, H = 2, 40, 16, 32

    key = jax.random.PRNGKey(0)
    kx, kw, kb, kg, kbt = jax.random.split(key, 5)

    x = jax.random.normal(kx, (B, S, D), dtype=jnp.float32)
    bound = 1.0 / (D ** 0.5)
    weight = jax.random.uniform(kw, (H, D), jnp.float32, -bound, bound)
    bias = jax.random.uniform(kb, (H,), jnp.float32, -bound, bound)
    gamma = 1.0 + 0.1 * jax.random.normal(kg, (H,), jnp.float32)
    beta = 0.1 * jax.random.normal(kbt, (H,), jnp.float32)

    out = jax.block_until_ready(dense_block_forward(x, weight, bias, gamma, beta, tm=32))
    assert out.shape == (B, S, H)

    # Tight check vs a reference using the same bf16-quantized matmul operands.
    xq = x.astype(jnp.bfloat16).astype(jnp.float32)
    wq = weight.astype(jnp.bfloat16).astype(jnp.float32)
    ref_q = reference_forward(xq, wq, bias, gamma, beta)
    assert jnp.allclose(out, ref_q, atol=2e-3, rtol=2e-3), "mismatch vs bf16 reference"

    # Loose sanity check vs the pure-f32 torch-equivalent reference
    # (difference comes only from bf16 quantization of the matmul inputs).
    ref_f32 = reference_forward(x, weight, bias, gamma, beta)
    assert jnp.allclose(out, ref_f32, atol=5e-2, rtol=5e-2), "mismatch vs f32 reference"

    # Default (auto-tiled) path as well.
    out2 = jax.block_until_ready(dense_block_forward(x, weight, bias, gamma, beta))
    assert jnp.allclose(out2, ref_q, atol=2e-3, rtol=2e-3), "mismatch (auto tm)"

    print("KERNEL_OK")
</pallas_src>

<mosaic_0001>
module attributes {stable_mosaic.version = 11 : i64} {
  func.func @_stats_kernel(%arg0: i32, %arg1: memref<32x128xbf16, #tpu.memory_space<vmem>>, %arg2: memref<128x128xbf16, #tpu.memory_space<vmem>>, %arg3: memref<1x1x128xf32, #tpu.memory_space<vmem>>, %arg4: memref<1x1x128xf32, #tpu.memory_space<vmem>>) attributes {dimension_semantics = [#tpu.dimension_semantics<parallel>], iteration_bounds = array<i64: 3>, scalar_prefetch = 0 : i64, scratch_operands = 0 : i64, tpu.core_type = #tpu.core_type<tc>, window_params = [{transform_indices = @transform_0, window_bounds = array<i64: 32, 128>}, {pipeline_mode = #tpu.pipeline_mode<synchronous>, transform_indices = @transform_1, window_bounds = array<i64: 128, 128>}, {transform_indices = @transform_2, window_bounds = array<i64: 1, 1, 128>}, {transform_indices = @transform_3, window_bounds = array<i64: 1, 1, 128>}]} {
    %c0 = arith.constant 0 : index
    %c0_0 = arith.constant 0 : index
    %0 = vector.load %arg1[%c0, %c0_0] : memref<32x128xbf16, #tpu.memory_space<vmem>>, vector<32x128xbf16>
    %c0_1 = arith.constant 0 : index
    %c0_2 = arith.constant 0 : index
    %1 = vector.load %arg2[%c0_1, %c0_2] : memref<128x128xbf16, #tpu.memory_space<vmem>>, vector<128x128xbf16>
    %cst = arith.constant dense<0.000000e+00> : vector<32x128xf32>
    %2 = tpu.matmul %0, %1, %cst {dimension_numbers = #tpu.dot_dimension_numbers<[1], [0], [0], [1], [0, 0, 1, 1], [], []>} : vector<32x128xbf16>, vector<128x128xbf16>, vector<32x128xf32> -> vector<32x128xf32>
    %cst_3 = arith.constant 1.000000e+00 : f32
    %3 = vector.broadcast %cst_3 : f32 to vector<1x32xf32>
    %cst_4 = arith.constant dense<0.000000e+00> : vector<1x128xf32>
    %4 = tpu.matmul %3, %2, %cst_4 {dimension_numbers = #tpu.dot_dimension_numbers<[1], [0], [0], [1], [0, 0, 1, 1], [], []>} : vector<1x32xf32>, vector<32x128xf32>, vector<1x128xf32> -> vector<1x128xf32>
    %c0_5 = arith.constant 0 : index
    %c0_6 = arith.constant 0 : index
    %c0_7 = arith.constant 0 : index
    %5 = vector.load %arg3[%c0_5, %c0_6, %c0_7] : memref<1x1x128xf32, #tpu.memory_space<vmem>>, vector<1x1x128xf32>
    %6 = vector.shape_cast %5 : vector<1x1x128xf32> to vector<1x128xf32>
    %7 = vector.shape_cast %4 : vector<1x128xf32> to vector<1x1x128xf32>
    tpu.vector_store %arg3[%c0_5, %c0_6, %c0_7], %7 {strides = array<i32>} : memref<1x1x128xf32, #tpu.memory_space<vmem>>, vector<1x1x128xf32>,
    %8 = arith.mulf %2, %2 : vector<32x128xf32>
    %cst_8 = arith.constant dense<0.000000e+00> : vector<1x128xf32>
    %9 = tpu.matmul %3, %8, %cst_8 {dimension_numbers = #tpu.dot_dimension_numbers<[1], [0], [0], [1], [0, 0, 1, 1], [], []>} : vector<1x32xf32>, vector<32x128xf32>, vector<1x128xf32> -> vector<1x128xf32>
    %c0_9 = arith.constant 0 : index
    %c0_10 = arith.constant 0 : index
    %c0_11 = arith.constant 0 : index
    %10 = vector.load %arg4[%c0_9, %c0_10, %c0_11] : memref<1x1x128xf32, #tpu.memory_space<vmem>>, vector<1x1x128xf32>
    %11 = vector.shape_cast %10 : vector<1x1x128xf32> to vector<1x128xf32>
    %12 = vector.shape_cast %9 : vector<1x128xf32> to vector<1x1x128xf32>
    tpu.vector_store %arg4[%c0_9, %c0_10, %c0_11], %12 {strides = array<i32>} : memref<1x1x128xf32, #tpu.memory_space<vmem>>, vector<1x1x128xf32>,
    return
  }
  func.func @transform_0(%arg0: i32) -> (i32, i32) {
    %c0_i32 = arith.constant 0 : i32
    %c0_i32_0 = arith.constant 0 : i32
    return %arg0, %c0_i32 : i32, i32
  }
  func.func @transform_1(%arg0: i32) -> (i32, i32) {
    %c0_i32 = arith.constant 0 : i32
    %c0_i32_0 = arith.constant 0 : i32
    %c0_i32_1 = arith.constant 0 : i32
    return %c0_i32, %c0_i32_0 : i32, i32
  }
  func.func @transform_2(%arg0: i32) -> (i32, i32, i32) {
    %c0_i32 = arith.constant 0 : i32
    %c0_i32_0 = arith.constant 0 : i32
    %c0_i32_1 = arith.constant 0 : i32
    return %arg0, %c0_i32, %c0_i32_0 : i32, i32, i32
  }
  func.func @transform_3(%arg0: i32) -> (i32, i32, i32) {
    %c0_i32 = arith.constant 0 : i32
    %c0_i32_0 = arith.constant 0 : i32
    %c0_i32_1 = arith.constant 0 : i32
    return %arg0, %c0_i32, %c0_i32_0 : i32, i32, i32
  }
}

module attributes {stable_mosaic.version = 11 : i64} {
  func.func @_apply_kernel(%arg0: i32, %arg1: memref<32x128xbf16, #tpu.memory_space<vmem>>, %arg2: memref<128x128xbf16, #tpu.memory_space<vmem>>, %arg3: memref<1x128xf32, #tpu.memory_space<vmem>>, %arg4: memref<1x128xf32, #tpu.memory_space<vmem>>, %arg5: memref<32x128xf32, #tpu.memory_space<vmem>>) attributes {dimension_semantics = [#tpu.dimension_semantics<parallel>], iteration_bounds = array<i64: 3>, scalar_prefetch = 0 : i64, scratch_operands = 0 : i64, tpu.core_type = #tpu.core_type<tc>, window_params = [{transform_indices = @transform_0, window_bounds = array<i64: 32, 128>}, {pipeline_mode = #tpu.pipeline_mode<synchronous>, transform_indices = @transform_1, window_bounds = array<i64: 128, 128>}, {pipeline_mode = #tpu.pipeline_mode<synchronous>, transform_indices = @transform_2, window_bounds = array<i64: 1, 128>}, {pipeline_mode = #tpu.pipeline_mode<synchronous>, transform_indices = @transform_3, window_bounds = array<i64: 1, 128>}, {transform_indices = @transform_4, window_bounds = array<i64: 32, 128>}]} {
    %c0 = arith.constant 0 : index
    %c0_0 = arith.constant 0 : index
    %0 = vector.load %arg1[%c0, %c0_0] : memref<32x128xbf16, #tpu.memory_space<vmem>>, vector<32x128xbf16>
    %c0_1 = arith.constant 0 : index
    %c0_2 = arith.constant 0 : index
    %1 = vector.load %arg2[%c0_1, %c0_2] : memref<128x128xbf16, #tpu.memory_space<vmem>>, vector<128x128xbf16>
    %cst = arith.constant dense<0.000000e+00> : vector<32x128xf32>
    %2 = tpu.matmul %0, %1, %cst {dimension_numbers = #tpu.dot_dimension_numbers<[1], [0], [0], [1], [0, 0, 1, 1], [], []>} : vector<32x128xbf16>, vector<128x128xbf16>, vector<32x128xf32> -> vector<32x128xf32>
    %c0_3 = arith.constant 0 : index
    %c0_4 = arith.constant 0 : index
    %3 = vector.load %arg3[%c0_3, %c0_4] : memref<1x128xf32, #tpu.memory_space<vmem>>, vector<1x128xf32>
    %4 = vector.broadcast %3 : vector<1x128xf32> to vector<32x128xf32>
    %5 = arith.mulf %2, %4 : vector<32x128xf32>
    %c0_5 = arith.constant 0 : index
    %c0_6 = arith.constant 0 : index
    %6 = vector.load %arg4[%c0_5, %c0_6] : memref<1x128xf32, #tpu.memory_space<vmem>>, vector<1x128xf32>
    %7 = vector.broadcast %6 : vector<1x128xf32> to vector<32x128xf32>
    %8 = arith.addf %5, %7 : vector<32x128xf32>
    %cst_7 = arith.constant 0.00999999977 : f32
    %9 = vector.broadcast %cst_7 : f32 to vector<32x128xf32>
    %10 = arith.mulf %9, %8 : vector<32x128xf32>
    %11 = arith.maximumf %8, %10 : vector<32x128xf32>
    %c0_8 = arith.constant 0 : index
    %c0_9 = arith.constant 0 : index
    %12 = vector.load %arg5[%c0_8, %c0_9] : memref<32x128xf32, #tpu.memory_space<vmem>>, vector<32x128xf32>
    tpu.vector_store %arg5[%c0_8, %c0_9], %11 {strides = array<i32>} : memref<32x128xf32, #tpu.memory_space<vmem>>, vector<32x128xf32>,
    return
  }
  func.func @transform_0(%arg0: i32) -> (i32, i32) {
    %c0_i32 = arith.constant 0 : i32
    %c0_i32_0 = arith.constant 0 : i32
    return %arg0, %c0_i32 : i32, i32
  }
  func.func @transform_1(%arg0: i32) -> (i32, i32) {
    %c0_i32 = arith.constant 0 : i32
    %c0_i32_0 = arith.constant 0 : i32
    %c0_i32_1 = arith.constant 0 : i32
    return %c0_i32, %c0_i32_0 : i32, i32
  }
  func.func @transform_2(%arg0: i32) -> (i32, i32) {
    %c0_i32 = arith.constant 0 : i32
    %c0_i32_0 = arith.constant 0 : i32
    %c0_i32_1 = arith.constant 0 : i32
    return %c0_i32, %c0_i32_0 : i32, i32
  }
  func.func @transform_3(%arg0: i32) -> (i32, i32) {
    %c0_i32 = arith.constant 0 : i32
    %c0_i32_0 = arith.constant 0 : i32
    %c0_i32_1 = arith.constant 0 : i32
    return %c0_i32, %c0_i32_0 : i32, i32
  }
  func.func @transform_4(%arg0: i32) -> (i32, i32) {
    %c0_i32 = arith.constant 0 : i32
    %c0_i32_0 = arith.constant 0 : i32
    return %arg0, %c0_i32 : i32, i32
  }
}

</mosaic_0001>

<llo_original>
// kernel: dense_block_forward.2
$region0: #{dense_block_forward.2}
  #allocation0 [shape = 'u32[]', space=smem, size = 0x4, offset = 0x4, fixed_abs, tag = 'smem constant byte address 0x4 - core index']
  #allocation1 [shape = 'u32[72,128]{1,0:T(1,128)}', space=vmem, size = 0x9000, scoped, tag = 'internal scratch']
  %s0 = inlined_call_operand.vmem [shape: bf16[96,128], index: 0, kind: input, shape index: {}]
  %s1 = inlined_call_operand.vmem [shape: bf16[128,128], index: 1, kind: input, shape index: {}]
  %s2 = inlined_call_operand.vmem [shape: f32[3,1,128], index: 2, kind: output, shape index: {0}]
  %s3 = inlined_call_operand.vmem [shape: f32[3,1,128], index: 3, kind: output, shape index: {1}]
  %4 = xla_tuple %s2, %s3
  %s5 = sld [smem:[#allocation0]]
  $region49: #{dense_block_forward.2} parent=0
    _
  %s7 = ssub.s32 1, %s5
  %s8 = scalar_select 0, %s7, %s5
  loop: start=0, step=1, limit=5
  $region2: #{dense_block_forward.2} parent=0 // loop_pre_header
    _
  $region3: #{dense_block_forward.2} parent=0 // loop_header
    %s10 = sphi 0, %s14
    %p11 = scmp.ge.s32.totalorder %s10, 5
    %s20 = sphi 0, %s22
    %s23 = sphi 0, %s20
    %s24 = sphi 0, %s23
    %s40 = sphi 0, %s24
    %s44 = sphi 0, %s44
    %s46 = sphi 0, %s44
    %s47 = sphi 0, %s46
    %s61 = sphi 0, %s47
    %s67 = sphi 0, %s69
    %s70 = sphi 0, %s67
    %s71 = sphi 0, %s70
    %s87 = sphi 0, %s71
    %s93 = sphi 0, %s95
    %s96 = sphi 0, %s93
    %s97 = sphi 0, %s96
    %s113 = sphi 0, %s97
  $region4: #{dense_block_forward.2} parent=0 // loop_header_branch
    %13 = sbr.rel (%p11) target = $region8
  $region5: #{dense_block_forward.2} parent=0 // loop_body
    %s15 = ssub.s32 %s10, 1
    %s16 = ssub.s32 %s10, 2
    %s17 = sadd.s32 %s10, 1
    %s18 = ssub.s32 %s10, %s17
    %p19 = scmp.eq.s32.totalorder %s18, 0
    %s21 = sadd.s32 %s20, 1
    %s22 = scalar_select %p19, %s20, %s21
    %p25 = pneg %p19
    %p26 = scmp.eq.s32.totalorder %s10, 2
    %p27 = por %p25, %p26
    %p28 = scmp.ne.s32.totalorder %s20, %s23
    %p29 = scmp.eq.s32.totalorder %s10, 0
    %p30 = por %p28, %p29
    %p31 = scmp.ne.s32.totalorder %s20, %s23
    %p32 = scmp.eq.s32.totalorder %s15, 2
    %p33 = por %p31, %p32
    %p34 = scmp.ne.s32.totalorder %s23, %s24
    %p35 = scmp.eq.s32.totalorder %s15, 0
    %p36 = por %p34, %p35
    %p37 = scmp.ne.s32.totalorder %s23, %s24
    %p38 = scmp.eq.s32.totalorder %s16, 2
    %p39 = por %p37, %p38
    %p41 = scmp.ne.s32.totalorder %s24, %s40
    %p42 = scmp.eq.s32.totalorder %s16, 0
    %p43 = por %p41, %p42
    %s45 = sadd.s32 %s44, 1
    %p48 = scmp.eq.s32.totalorder %s10, 2
    %p49 = scmp.ne.s32.totalorder %s44, %s46
    %p50 = scmp.eq.s32.totalorder %s10, 0
    %p51 = por %p49, %p50
    %p52 = scmp.ne.s32.totalorder %s44, %s46
    %p53 = scmp.eq.s32.totalorder %s15, 2
    %p54 = por %p52, %p53
    %p55 = scmp.ne.s32.totalorder %s46, %s47
    %p56 = scmp.eq.s32.totalorder %s15, 0
    %p57 = por %p55, %p56
    %p58 = scmp.ne.s32.totalorder %s46, %s47
    %p59 = scmp.eq.s32.totalorder %s16, 2
    %p60 = por %p58, %p59
    %p62 = scmp.ne.s32.totalorder %s47, %s61
    %p63 = scmp.eq.s32.totalorder %s16, 0
    %p64 = por %p62, %p63
    %s65 = ssub.s32 %s10, %s17
    %p66 = scmp.eq.s32.totalorder %s65, 0
    %s68 = sadd.s32 %s67, 1
    %s69 = scalar_select %p66, %s67, %s68
    %p72 = pneg %p66
    %p73 = scmp.eq.s32.totalorder %s10, 2
    %p74 = por %p72, %p73
    %p75 = scmp.ne.s32.totalorder %s67, %s70
    %p76 = scmp.eq.s32.totalorder %s10, 0
    %p77 = por %p75, %p76
    %p78 = scmp.ne.s32.totalorder %s67, %s70
    %p79 = scmp.eq.s32.totalorder %s15, 2
    %p80 = por %p78, %p79
    %p81 = scmp.ne.s32.totalorder %s70, %s71
    %p82 = scmp.eq.s32.totalorder %s15, 0
    %p83 = por %p81, %p82
    %p84 = scmp.ne.s32.totalorder %s70, %s71
    %p85 = scmp.eq.s32.totalorder %s16, 2
    %p86 = por %p84, %p85
    %p88 = scmp.ne.s32.totalorder %s71, %s87
    %p89 = scmp.eq.s32.totalorder %s16, 0
    %p90 = por %p88, %p89
    %s91 = ssub.s32 %s10, %s17
    %p92 = scmp.eq.s32.totalorder %s91, 0
    %s94 = sadd.s32 %s93, 1
    %s95 = scalar_select %p92, %s93, %s94
    %p98 = pneg %p92
    %p99 = scmp.eq.s32.totalorder %s10, 2
    %p100 = por %p98, %p99
    %p101 = scmp.ne.s32.totalorder %s93, %s96
    %p102 = scmp.eq.s32.totalorder %s10, 0
    %p103 = por %p101, %p102
    %p104 = scmp.ne.s32.totalorder %s93, %s96
    %p105 = scmp.eq.s32.totalorder %s15, 2
    %p106 = por %p104, %p105
    %p107 = scmp.ne.s32.totalorder %s96, %s97
    %p108 = scmp.eq.s32.totalorder %s15, 0
    %p109 = por %p107, %p108
    %p110 = scmp.ne.s32.totalorder %s96, %s97
    %p111 = scmp.eq.s32.totalorder %s16, 2
    %p112 = por %p110, %p111
    %p114 = scmp.ne.s32.totalorder %s97, %s113
    %p115 = scmp.eq.s32.totalorder %s16, 0
    %p116 = por %p114, %p115
    %p117 = scmp.le.s32.totalorder 1, %s10
    %p118 = scmp.lt.s32.totalorder %s10, 4
    %p119 = pnand %p117, %p118
    %p120 = pneg %p119
    // Predicated region
    $region9: #{dense_block_forward.2} parent=5 // pred_check
      _
    $region10: #{dense_block_forward.2} parent=5 // pred_check_branch
      %122 = sbr.rel (%p119) target = $region12
    $region11: #{dense_block_forward.2} parent=5 // pred_region
      %s123 = ssub.s32 %s10, 1
      // Predicated region
      $region13: #{dense_block_forward.2} parent=11 // pred_check
        %p124 = pneg %p57
      $region14: #{dense_block_forward.2} parent=11 // pred_check_branch
        %126 = sbr.rel (%p124) target = $region16
      $region15: #{dense_block_forward.2} parent=11 // pred_region
        _
      $region16: #{dense_block_forward.2} parent=11 // pred_fallthru
        _
    $region12: #{dense_block_forward.2} parent=5 // pred_fallthru
      _
    %p127 = scmp.lt.s32.totalorder %s10, 3
    // Predicated region
    $region17: #{dense_block_forward.2} parent=5 // pred_check
      %p128 = pneg %p127
    $region18: #{dense_block_forward.2} parent=5 // pred_check_branch
      %130 = sbr.rel (%p128) target = $region20
    $region19: #{dense_block_forward.2} parent=5 // pred_region
      // Predicated region
      $region21: #{dense_block_forward.2} parent=19 // pred_check
        %p131 = pneg %p30
      $region22: #{dense_block_forward.2} parent=19 // pred_check_branch
        %133 = sbr.rel (%p131) target = $region24
      $region23: #{dense_block_forward.2} parent=19 // pred_region
        %s134 = smul.u32 4, %s10
        %p135 = scmp.lt.s32.totalorder %s134, 11
        %s136 = scalar_select %p135, %s134, 11
        %s137 = smul.addr %s136, 4
        %s138 = scalar_lea.vmem %s0, %s137
        %s139 = smul.u32 4, %s10
      $region24: #{dense_block_forward.2} parent=19 // pred_fallthru
        _
    $region20: #{dense_block_forward.2} parent=5 // pred_fallthru
      _
    %p140 = scmp.le.s32.totalorder 1, %s10
    %p141 = scmp.lt.s32.totalorder %s10, 4
    %p142 = pnand %p140, %p141
    %p143 = pneg %p142
    // Predicated region
    $region25: #{dense_block_forward.2} parent=5 // pred_check
      _
    $region26: #{dense_block_forward.2} parent=5 // pred_check_branch
      %145 = sbr.rel (%p142) target = $region28
    $region27: #{dense_block_forward.2} parent=5 // pred_region
      %s146 = ssub.s32 %s10, 1
      %s147 = smul.u32 4, %s15
      %p148 = scmp.lt.s32.totalorder %s147, 11
      %s149 = scalar_select %p148, %s147, 11
      %s150 = smul.addr %s149, 4
      %s151 = scalar_lea.vmem %s0, %s150
      %p152 = pneg %p36
      %p153 = pneg %p33
      %p154 = pneg %p57
      %p155 = pneg %p54
      %p156 = pneg %p83
      %p157 = pneg %p80
      %p158 = scmp.lt.s32.totalorder %s15, 2
      %s159 = scalar_select %p158, %s15, 2
      %s160 = scalar_lea.vmem %s2, %s159
      %p161 = pneg %p109
      %p162 = pneg %p106
      %p163 = scmp.lt.s32.totalorder %s15, 2
      %s164 = scalar_select %p163, %s15, 2
      %s165 = scalar_lea.vmem %s3, %s164
      %s166 = smul.u32 4, %s15
      %p167 = scmp.lt.s32.totalorder %s166, 11
      %s168 = scalar_select %p167, %s166, 11
      %s169 = smul.addr %s168, 4
      %s170 = scalar_lea.vmem %s0, %s169
      %s171 = smul.u32 4, %s15
      %p172 = scmp.lt.s32.totalorder %s15, 2
      %s173 = scalar_select %p172, %s15, 2
      %s174 = scalar_lea.vmem %s2, %s173
      %p175 = scmp.lt.s32.totalorder %s15, 2
      %s176 = scalar_select %p175, %s15, 2
      %s177 = scalar_lea.vmem %s3, %s176
      %v178 = vld [vmem:[%s170] sm:$0xf]
      %v179 = vld [vmem:[%s170 + $0x4] sm:$0xf]
      %v180 = vld [vmem:[%s170 + $0x8] sm:$0xf]
      %v181 = vld [vmem:[%s170 + $0xc] sm:$0xf]
      %v182 = vld [vmem:[%s1] sm:$0xf]
      %v183 = vld [vmem:[%s1 + $0x4] sm:$0xf]
      %v184 = vld [vmem:[%s1 + $0x8] sm:$0xf]
      %v185 = vld [vmem:[%s1 + $0xc] sm:$0xf]
      %v186 = vld [vmem:[%s1 + $0x10] sm:$0xf]
      %v187 = vld [vmem:[%s1 + $0x14] sm:$0xf]
      %v188 = vld [vmem:[%s1 + $0x18] sm:$0xf]
      %v189 = vld [vmem:[%s1 + $0x1c] sm:$0xf]
      %v190 = vld [vmem:[%s1 + $0x20] sm:$0xf]
      %v191 = vld [vmem:[%s1 + $0x24] sm:$0xf]
      %v192 = vld [vmem:[%s1 + $0x28] sm:$0xf]
      %v193 = vld [vmem:[%s1 + $0x2c] sm:$0xf]
      %v194 = vld [vmem:[%s1 + $0x30] sm:$0xf]
      %v195 = vld [vmem:[%s1 + $0x34] sm:$0xf]
      %v196 = vld [vmem:[%s1 + $0x38] sm:$0xf]
      %v197 = vld [vmem:[%s1 + $0x3c] sm:$0xf]
      %v202 = vunpack.c.l.b16 %v178
      %v203 = vunpack.c.l.b16 %v179
      %v204 = vunpack.c.l.b16 %v180
      %v205 = vunpack.c.l.b16 %v181
      %v206 = vpack.c.b16 %v203, %v202
      %v207 = vpack.c.b16 %v205, %v204
      %v226 = vunpack.c.l.b16 %v182
      %v227 = vunpack.c.l.b16 %v183
      %v228 = vunpack.c.l.b16 %v184
      %v229 = vunpack.c.l.b16 %v185
      %v230 = vunpack.c.l.b16 %v186
      %v231 = vunpack.c.l.b16 %v187
      %v232 = vunpack.c.l.b16 %v188
      %v233 = vunpack.c.l.b16 %v189
      %v234 = vunpack.c.l.b16 %v190
      %v235 = vunpack.c.l.b16 %v191
      %v236 = vunpack.c.l.b16 %v192
      %v237 = vunpack.c.l.b16 %v193
      %v238 = vunpack.c.l.b16 %v194
      %v239 = vunpack.c.l.b16 %v195
      %v240 = vunpack.c.l.b16 %v196
      %v241 = vunpack.c.l.b16 %v197
      %v242 = vpack.c.b16 %v227, %v226
      %v243 = vpack.c.b16 %v229, %v228
      %v244 = vpack.c.b16 %v231, %v230
      %v245 = vpack.c.b16 %v233, %v232
      %v246 = vpack.c.b16 %v235, %v234
      %v247 = vpack.c.b16 %v237, %v236
      %v248 = vpack.c.b16 %v239, %v238
      %v249 = vpack.c.b16 %v241, %v240
      %258 = vmatpush.bf16.msra.mxu0 %v249
      %259 = vmatpush.bf16.msra.mxu0 %v248
      %260 = vmatpush.bf16.msra.mxu0 %v247
      %261 = vmatpush.bf16.msra.mxu0 %v246
      %262 = vmatpush.bf16.msra.mxu0 %v245
      %263 = vmatpush.bf16.msra.mxu0 %v244
      %264 = vmatpush.bf16.msra.mxu0 %v243
      %265 = vmatpush.bf16.msra.mxu0 %v242
      %266 = vmatmul.bf16.gmra.mxu0 %v206
      %v267 = vpop.f32.mrf.mxu0
      %v268 = vadd.f32 0.0, %v267
      %v269 = vpop.f32.mrf.mxu0
      %v270 = vadd.f32 0.0, %v269
      %271 = vmatmul.bf16.gmra.mxu0 %v207
      %v272 = vpop.f32.mrf.mxu0
      %v273 = vadd.f32 0.0, %v272
      %v274 = vpop.f32.mrf.mxu0
      %v275 = vadd.f32 0.0, %v274
      %276 = vdwg.mxu0
      %vm277 = vcmask 261120
      %v279 = vsel %vm277, 1.0, 0
      %281 = vmatpush.msra.mxu0 0.0
      %282 = vmatpush.msra.mxu0 0.0
      %283 = vmatpush.msra.mxu0 0.0
      %284 = vmatpush.msra.mxu0 0.0
      %285 = vmatpush.msra.mxu0 0.0
      %286 = vmatpush.msra.mxu0 0.0
      %287 = vmatpush.msra.mxu0 0.0
      %288 = vmatpush.msra.mxu0 0.0
      %289 = vmatpush.msra.mxu0 0.0
      %290 = vmatpush.msra.mxu0 0.0
      %291 = vmatpush.msra.mxu0 0.0
      %292 = vmatpush.msra.mxu0 0.0
      %293 = vmatpush.msra.mxu0 %v275
      %294 = vmatpush.msra.mxu0 %v273
      %295 = vmatpush.msra.mxu0 %v270
      %296 = vmatpush.msra.mxu0 %v268
      %297 = vmatmul.f32.gmra.mxu0 %v279
      %v298 = vpop.f32.mrf.mxu0
      %v299 = vadd.f32 0.0, %v298
      %300 = vdwg.mxu0
      %301 = vst [vmem:[%s174] sm:$0x1] %v299
      %v302 = vmul.f32 %v268, %v268
      %v303 = vmul.f32 %v270, %v270
      %v304 = vmul.f32 %v273, %v273
      %v305 = vmul.f32 %v275, %v275
      %306 = vmatpush.msra.mxu0 0.0
      %307 = vmatpush.msra.mxu0 0.0
      %308 = vmatpush.msra.mxu0 0.0
      %309 = vmatpush.msra.mxu0 0.0
      %310 = vmatpush.msra.mxu0 0.0
      %311 = vmatpush.msra.mxu0 0.0
      %312 = vmatpush.msra.mxu0 0.0
      %313 = vmatpush.msra.mxu0 0.0
      %314 = vmatpush.msra.mxu0 0.0
      %315 = vmatpush.msra.mxu0 0.0
      %316 = vmatpush.msra.mxu0 0.0
      %317 = vmatpush.msra.mxu0 0.0
      %318 = vmatpush.msra.mxu0 %v305
      %319 = vmatpush.msra.mxu0 %v304
      %320 = vmatpush.msra.mxu0 %v303
      %321 = vmatpush.msra.mxu0 %v302
      %322 = vmatmul.f32.gmra.mxu0 %v279
      %v323 = vpop.f32.mrf.mxu0
      %v324 = vadd.f32 0.0, %v323
      %325 = vdwg.mxu0
      %326 = vst [vmem:[%s177] sm:$0x1] %v324
      %p327 = scmp.lt.s32.totalorder %s15, 2
      %s328 = scalar_select %p327, %s15, 2
      %s329 = scalar_lea.vmem %s2, %s328
      %p330 = scmp.lt.s32.totalorder %s15, 2
      %s331 = scalar_select %p330, %s15, 2
      %s332 = scalar_lea.vmem %s3, %s331
      // Predicated region
      $region29: #{dense_block_forward.2} parent=27 // pred_check
        %p333 = pneg %p80
      $region30: #{dense_block_forward.2} parent=27 // pred_check_branch
        %335 = sbr.rel (%p333) target = $region32
      $region31: #{dense_block_forward.2} parent=27 // pred_region
        _
      $region32: #{dense_block_forward.2} parent=27 // pred_fallthru
        _
      // Predicated region
      $region33: #{dense_block_forward.2} parent=27 // pred_check
        %p336 = pneg %p106
      $region34: #{dense_block_forward.2} parent=27 // pred_check_branch
        %338 = sbr.rel (%p336) target = $region36
      $region35: #{dense_block_forward.2} parent=27 // pred_region
        _
      $region36: #{dense_block_forward.2} parent=27 // pred_fallthru
        _
    $region28: #{dense_block_forward.2} parent=5 // pred_fallthru
      _
    %p339 = scmp.le.s32.totalorder 2, %s10
    // Predicated region
    $region37: #{dense_block_forward.2} parent=5 // pred_check
      %p340 = pneg %p339
    $region38: #{dense_block_forward.2} parent=5 // pred_check_branch
      %342 = sbr.rel (%p340) target = $region40
    $region39: #{dense_block_forward.2} parent=5 // pred_region
      %s343 = ssub.s32 %s10, 2
      // Predicated region
      $region41: #{dense_block_forward.2} parent=39 // pred_check
        %p344 = pneg %p86
      $region42: #{dense_block_forward.2} parent=39 // pred_check_branch
        %346 = sbr.rel (%p344) target = $region44
      $region43: #{dense_block_forward.2} parent=39 // pred_region
        %p347 = scmp.lt.s32.totalorder %s16, 2
        %s348 = scalar_select %p347, %s16, 2
        %s349 = scalar_lea.vmem %s2, %s348
      $region44: #{dense_block_forward.2} parent=39 // pred_fallthru
        _
      // Predicated region
      $region45: #{dense_block_forward.2} parent=39 // pred_check
        %p350 = pneg %p112
      $region46: #{dense_block_forward.2} parent=39 // pred_check_branch
        %352 = sbr.rel (%p350) target = $region48
      $region47: #{dense_block_forward.2} parent=39 // pred_region
        %p353 = scmp.lt.s32.totalorder %s16, 2
        %s354 = scalar_select %p353, %s16, 2
        %s355 = scalar_lea.vmem %s3, %s354
      $region48: #{dense_block_forward.2} parent=39 // pred_fallthru
        _
    $region40: #{dense_block_forward.2} parent=5 // pred_fallthru
      _
  $region6: #{dense_block_forward.2} parent=0 // loop_footer
    %s14 = sadd.s32 1, %s10
  $region7: #{dense_block_forward.2} parent=0 // loop_footer_branch
    %9 = sbr.rel target = $region3
  $region8: #{dense_block_forward.2} parent=0 // loop_exit
    _

// kernel: dense_block_forward.3
$region0: #{dense_block_forward.3}
  #allocation0 [shape = 'u32[]', space=smem, size = 0x4, offset = 0x4, fixed_abs, tag = 'smem constant byte address 0x4 - core index']
  #allocation1 [shape = 'u32[72,128]{1,0:T(1,128)}', space=vmem, size = 0x9000, scoped, tag = 'internal scratch']
  %s0 = inlined_call_operand.vmem [shape: bf16[96,128], index: 0, kind: input, shape index: {}]
  %s1 = inlined_call_operand.vmem [shape: bf16[128,128], index: 1, kind: input, shape index: {}]
  %s2 = inlined_call_operand.vmem [shape: f32[1,128], index: 2, kind: input, shape index: {}]
  %s3 = inlined_call_operand.vmem [shape: f32[1,128], index: 3, kind: input, shape index: {}]
  %s4 = inlined_call_operand.vmem [shape: f32[96,128], index: 4, kind: output, shape index: {}]
  %s5 = sld [smem:[#allocation0]]
  $region49: #{dense_block_forward.3} parent=0
    _
  %s7 = ssub.s32 1, %s5
  %s8 = scalar_select 0, %s7, %s5
  loop: start=0, step=1, limit=5
  $region2: #{dense_block_forward.3} parent=0 // loop_pre_header
    _
  $region3: #{dense_block_forward.3} parent=0 // loop_header
    %s10 = sphi 0, %s14
    %p11 = scmp.ge.s32.totalorder %s10, 5
    %s20 = sphi 0, %s22
    %s23 = sphi 0, %s20
    %s24 = sphi 0, %s23
    %s40 = sphi 0, %s24
    %s44 = sphi 0, %s44
    %s46 = sphi 0, %s44
    %s47 = sphi 0, %s46
    %s61 = sphi 0, %s47
    %s65 = sphi 0, %s65
    %s67 = sphi 0, %s65
    %s68 = sphi 0, %s67
    %s82 = sphi 0, %s68
    %s86 = sphi 0, %s86
    %s88 = sphi 0, %s86
    %s89 = sphi 0, %s88
    %s103 = sphi 0, %s89
    %s109 = sphi 0, %s111
    %s112 = sphi 0, %s109
    %s113 = sphi 0, %s112
    %s129 = sphi 0, %s113
  $region4: #{dense_block_forward.3} parent=0 // loop_header_branch
    %13 = sbr.rel (%p11) target = $region8
  $region5: #{dense_block_forward.3} parent=0 // loop_body
    %s15 = ssub.s32 %s10, 1
    %s16 = ssub.s32 %s10, 2
    %s17 = sadd.s32 %s10, 1
    %s18 = ssub.s32 %s10, %s17
    %p19 = scmp.eq.s32.totalorder %s18, 0
    %s21 = sadd.s32 %s20, 1
    %s22 = scalar_select %p19, %s20, %s21
    %p25 = pneg %p19
    %p26 = scmp.eq.s32.totalorder %s10, 2
    %p27 = por %p25, %p26
    %p28 = scmp.ne.s32.totalorder %s20, %s23
    %p29 = scmp.eq.s32.totalorder %s10, 0
    %p30 = por %p28, %p29
    %p31 = scmp.ne.s32.totalorder %s20, %s23
    %p32 = scmp.eq.s32.totalorder %s15, 2
    %p33 = por %p31, %p32
    %p34 = scmp.ne.s32.totalorder %s23, %s24
    %p35 = scmp.eq.s32.totalorder %s15, 0
    %p36 = por %p34, %p35
    %p37 = scmp.ne.s32.totalorder %s23, %s24
    %p38 = scmp.eq.s32.totalorder %s16, 2
    %p39 = por %p37, %p38
    %p41 = scmp.ne.s32.totalorder %s24, %s40
    %p42 = scmp.eq.s32.totalorder %s16, 0
    %p43 = por %p41, %p42
    %s45 = sadd.s32 %s44, 1
    %p48 = scmp.eq.s32.totalorder %s10, 2
    %p49 = scmp.ne.s32.totalorder %s44, %s46
    %p50 = scmp.eq.s32.totalorder %s10, 0
    %p51 = por %p49, %p50
    %p52 = scmp.ne.s32.totalorder %s44, %s46
    %p53 = scmp.eq.s32.totalorder %s15, 2
    %p54 = por %p52, %p53
    %p55 = scmp.ne.s32.totalorder %s46, %s47
    %p56 = scmp.eq.s32.totalorder %s15, 0
    %p57 = por %p55, %p56
    %p58 = scmp.ne.s32.totalorder %s46, %s47
    %p59 = scmp.eq.s32.totalorder %s16, 2
    %p60 = por %p58, %p59
    %p62 = scmp.ne.s32.totalorder %s47, %s61
    %p63 = scmp.eq.s32.totalorder %s16, 0
    %p64 = por %p62, %p63
    %s66 = sadd.s32 %s65, 1
    %p69 = scmp.eq.s32.totalorder %s10, 2
    %p70 = scmp.ne.s32.totalorder %s65, %s67
    %p71 = scmp.eq.s32.totalorder %s10, 0
    %p72 = por %p70, %p71
    %p73 = scmp.ne.s32.totalorder %s65, %s67
    %p74 = scmp.eq.s32.totalorder %s15, 2
    %p75 = por %p73, %p74
    %p76 = scmp.ne.s32.totalorder %s67, %s68
    %p77 = scmp.eq.s32.totalorder %s15, 0
    %p78 = por %p76, %p77
    %p79 = scmp.ne.s32.totalorder %s67, %s68
    %p80 = scmp.eq.s32.totalorder %s16, 2
    %p81 = por %p79, %p80
    %p83 = scmp.ne.s32.totalorder %s68, %s82
    %p84 = scmp.eq.s32.totalorder %s16, 0
    %p85 = por %p83, %p84
    %s87 = sadd.s32 %s86, 1
    %p90 = scmp.eq.s32.totalorder %s10, 2
    %p91 = scmp.ne.s32.totalorder %s86, %s88
    %p92 = scmp.eq.s32.totalorder %s10, 0
    %p93 = por %p91, %p92
    %p94 = scmp.ne.s32.totalorder %s86, %s88
    %p95 = scmp.eq.s32.totalorder %s15, 2
    %p96 = por %p94, %p95
    %p97 = scmp.ne.s32.totalorder %s88, %s89
    %p98 = scmp.eq.s32.totalorder %s15, 0
    %p99 = por %p97, %p98
    %p100 = scmp.ne.s32.totalorder %s88, %s89
    %p101 = scmp.eq.s32.totalorder %s16, 2
    %p102 = por %p100, %p101
    %p104 = scmp.ne.s32.totalorder %s89, %s103
    %p105 = scmp.eq.s32.totalorder %s16, 0
    %p106 = por %p104, %p105
    %s107 = ssub.s32 %s10, %s17
    %p108 = scmp.eq.s32.totalorder %s107, 0
    %s110 = sadd.s32 %s109, 1
    %s111 = scalar_select %p108, %s109, %s110
    %p114 = pneg %p108
    %p115 = scmp.eq.s32.totalorder %s10, 2
    %p116 = por %p114, %p115
    %p117 = scmp.ne.s32.totalorder %s109, %s112
    %p118 = scmp.eq.s32.totalorder %s10, 0
    %p119 = por %p117, %p118
    %p120 = scmp.ne.s32.totalorder %s109, %s112
    %p121 = scmp.eq.s32.totalorder %s15, 2
    %p122 = por %p120, %p121
    %p123 = scmp.ne.s32.totalorder %s112, %s113
    %p124 = scmp.eq.s32.totalorder %s15, 0
    %p125 = por %p123, %p124
    %p126 = scmp.ne.s32.totalorder %s112, %s113
    %p127 = scmp.eq.s32.totalorder %s16, 2
    %p128 = por %p126, %p127
    %p130 = scmp.ne.s32.totalorder %s113, %s129
    %p131 = scmp.eq.s32.totalorder %s16, 0
    %p132 = por %p130, %p131
    %p133 = scmp.le.s32.totalorder 1, %s10
    %p134 = scmp.lt.s32.totalorder %s10, 4
    %p135 = pnand %p133, %p134
    %p136 = pneg %p135
    // Predicated region
    $region9: #{dense_block_forward.3} parent=5 // pred_check
      _
    $region10: #{dense_block_forward.3} parent=5 // pred_check_branch
      %138 = sbr.rel (%p135) target = $region12
    $region11: #{dense_block_forward.3} parent=5 // pred_region
      %s139 = ssub.s32 %s10, 1
      // Predicated region
      $region13: #{dense_block_forward.3} parent=11 // pred_check
        %p140 = pneg %p57
      $region14: #{dense_block_forward.3} parent=11 // pred_check_branch
        %142 = sbr.rel (%p140) target = $region16
      $region15: #{dense_block_forward.3} parent=11 // pred_region
        _
      $region16: #{dense_block_forward.3} parent=11 // pred_fallthru
        _
      // Predicated region
      $region17: #{dense_block_forward.3} parent=11 // pred_check
        %p143 = pneg %p78
      $region18: #{dense_block_forward.3} parent=11 // pred_check_branch
        %145 = sbr.rel (%p143) target = $region20
      $region19: #{dense_block_forward.3} parent=11 // pred_region
        _
      $region20: #{dense_block_forward.3} parent=11 // pred_fallthru
        _
      // Predicated region
      $region21: #{dense_block_forward.3} parent=11 // pred_check
        %p146 = pneg %p99
      $region22: #{dense_block_forward.3} parent=11 // pred_check_branch
        %148 = sbr.rel (%p146) target = $region24
      $region23: #{dense_block_forward.3} parent=11 // pred_region
        _
      $region24: #{dense_block_forward.3} parent=11 // pred_fallthru
        _
    $region12: #{dense_block_forward.3} parent=5 // pred_fallthru
      _
    %p149 = scmp.lt.s32.totalorder %s10, 3
    // Predicated region
    $region25: #{dense_block_forward.3} parent=5 // pred_check
      %p150 = pneg %p149
    $region26: #{dense_block_forward.3} parent=5 // pred_check_branch
      %152 = sbr.rel (%p150) target = $region28
    $region27: #{dense_block_forward.3} parent=5 // pred_region
      // Predicated region
      $region29: #{dense_block_forward.3} parent=27 // pred_check
        %p153 = pneg %p30
      $region30: #{dense_block_forward.3} parent=27 // pred_check_branch
        %155 = sbr.rel (%p153) target = $region32
      $region31: #{dense_block_forward.3} parent=27 // pred_region
        %s156 = smul.u32 4, %s10
        %p157 = scmp.lt.s32.totalorder %s156, 11
        %s158 = scalar_select %p157, %s156, 11
        %s159 = smul.addr %s158, 4
        %s160 = scalar_lea.vmem %s0, %s159
        %s161 = smul.u32 4, %s10
      $region32: #{dense_block_forward.3} parent=27 // pred_fallthru
        _
    $region28: #{dense_block_forward.3} parent=5 // pred_fallthru
      _
    %p162 = scmp.le.s32.totalorder 1, %s10
    %p163 = scmp.lt.s32.totalorder %s10, 4
    %p164 = pnand %p162, %p163
    %p165 = pneg %p164
    // Predicated region
    $region33: #{dense_block_forward.3} parent=5 // pred_check
      _
    $region34: #{dense_block_forward.3} parent=5 // pred_check_branch
      %167 = sbr.rel (%p164) target = $region36
    $region35: #{dense_block_forward.3} parent=5 // pred_region
      %s168 = ssub.s32 %s10, 1
      %s169 = smul.u32 4, %s15
      %p170 = scmp.lt.s32.totalorder %s169, 11
      %s171 = scalar_select %p170, %s169, 11
      %s172 = smul.addr %s171, 4
      %s173 = scalar_lea.vmem %s0, %s172
      %p174 = pneg %p36
      %p175 = pneg %p33
      %p176 = pneg %p57
      %p177 = pneg %p54
      %p178 = pneg %p78
      %p179 = pneg %p75
      %p180 = pneg %p99
      %p181 = pneg %p96
      %p182 = pneg %p125
      %p183 = pneg %p122
      %s184 = smul.u32 4, %s15
      %p185 = scmp.lt.s32.totalorder %s184, 11
      %s186 = scalar_select %p185, %s184, 11
      %s187 = smul.addr %s186, 8
      %s188 = scalar_lea.vmem %s4, %s187
      %s189 = smul.u32 4, %s15
      %p190 = scmp.lt.s32.totalorder %s189, 11
      %s191 = scalar_select %p190, %s189, 11
      %s192 = smul.addr %s191, 4
      %s193 = scalar_lea.vmem %s0, %s192
      %s194 = smul.u32 4, %s15
      %s195 = smul.u32 4, %s15
      %p196 = scmp.lt.s32.totalorder %s195, 11
      %s197 = scalar_select %p196, %s195, 11
      %s198 = smul.addr %s197, 8
      %s199 = scalar_lea.vmem %s4, %s198
      %s200 = smul.u32 4, %s15
      %v201 = vld [vmem:[%s193] sm:$0xf]
      %v202 = vld [vmem:[%s193 + $0x4] sm:$0xf]
      %v203 = vld [vmem:[%s193 + $0x8] sm:$0xf]
      %v204 = vld [vmem:[%s193 + $0xc] sm:$0xf]
      %v205 = vld [vmem:[%s1] sm:$0xf]
      %v206 = vld [vmem:[%s1 + $0x4] sm:$0xf]
      %v207 = vld [vmem:[%s1 + $0x8] sm:$0xf]
      %v208 = vld [vmem:[%s1 + $0xc] sm:$0xf]
      %v209 = vld [vmem:[%s1 + $0x10] sm:$0xf]
      %v210 = vld [vmem:[%s1 + $0x14] sm:$0xf]
      %v211 = vld [vmem:[%s1 + $0x18] sm:$0xf]
      %v212 = vld [vmem:[%s1 + $0x1c] sm:$0xf]
      %v213 = vld [vmem:[%s1 + $0x20] sm:$0xf]
      %v214 = vld [vmem:[%s1 + $0x24] sm:$0xf]
      %v215 = vld [vmem:[%s1 + $0x28] sm:$0xf]
      %v216 = vld [vmem:[%s1 + $0x2c] sm:$0xf]
      %v217 = vld [vmem:[%s1 + $0x30] sm:$0xf]
      %v218 = vld [vmem:[%s1 + $0x34] sm:$0xf]
      %v219 = vld [vmem:[%s1 + $0x38] sm:$0xf]
      %v220 = vld [vmem:[%s1 + $0x3c] sm:$0xf]
      %v225 = vunpack.c.l.b16 %v201
      %v226 = vunpack.c.l.b16 %v202
      %v227 = vunpack.c.l.b16 %v203
      %v228 = vunpack.c.l.b16 %v204
      %v229 = vpack.c.b16 %v226, %v225
      %v230 = vpack.c.b16 %v228, %v227
      %v249 = vunpack.c.l.b16 %v205
      %v250 = vunpack.c.l.b16 %v206
      %v251 = vunpack.c.l.b16 %v207
      %v252 = vunpack.c.l.b16 %v208
      %v253 = vunpack.c.l.b16 %v209
      %v254 = vunpack.c.l.b16 %v210
      %v255 = vunpack.c.l.b16 %v211
      %v256 = vunpack.c.l.b16 %v212
      %v257 = vunpack.c.l.b16 %v213
      %v258 = vunpack.c.l.b16 %v214
      %v259 = vunpack.c.l.b16 %v215
      %v260 = vunpack.c.l.b16 %v216
      %v261 = vunpack.c.l.b16 %v217
      %v262 = vunpack.c.l.b16 %v218
      %v263 = vunpack.c.l.b16 %v219
      %v264 = vunpack.c.l.b16 %v220
      %v265 = vpack.c.b16 %v250, %v249
      %v266 = vpack.c.b16 %v252, %v251
      %v267 = vpack.c.b16 %v254, %v253
      %v268 = vpack.c.b16 %v256, %v255
      %v269 = vpack.c.b16 %v258, %v257
      %v270 = vpack.c.b16 %v260, %v259
      %v271 = vpack.c.b16 %v262, %v261
      %v272 = vpack.c.b16 %v264, %v263
      %281 = vmatpush.bf16.msra.mxu0 %v272
      %282 = vmatpush.bf16.msra.mxu0 %v271
      %283 = vmatpush.bf16.msra.mxu0 %v270
      %284 = vmatpush.bf16.msra.mxu0 %v269
      %285 = vmatpush.bf16.msra.mxu0 %v268
      %286 = vmatpush.bf16.msra.mxu0 %v267
      %287 = vmatpush.bf16.msra.mxu0 %v266
      %288 = vmatpush.bf16.msra.mxu0 %v265
      %289 = vmatmul.bf16.gmra.mxu0 %v229
      %v290 = vpop.f32.mrf.mxu0
      %v291 = vadd.f32 0.0, %v290
      %v292 = vpop.f32.mrf.mxu0
      %v293 = vadd.f32 0.0, %v292
      %294 = vmatmul.bf16.gmra.mxu0 %v230
      %v295 = vpop.f32.mrf.mxu0
      %v296 = vadd.f32 0.0, %v295
      %v297 = vpop.f32.mrf.mxu0
      %v298 = vadd.f32 0.0, %v297
      %299 = vdwg.mxu0
      %v300 = vld [vmem:[%s2] sm:$0x1]
      %v302 = vperm.slane %v300, 0
      %v304 = vmul.f32 %v291, %v302
      %v305 = vmul.f32 %v293, %v302
      %v306 = vmul.f32 %v296, %v302
      %v307 = vmul.f32 %v298, %v302
      %v308 = vld [vmem:[%s3] sm:$0x1]
      %v310 = vperm.slane %v308, 0
      %v312 = vadd.f32 %v304, %v310
      %v313 = vadd.f32 %v305, %v310
      %v314 = vadd.f32 %v306, %v310
      %v315 = vadd.f32 %v307, %v310
      %v316 = vmul.f32 %v312, 0.01
      %v317 = vmul.f32 %v313, 0.01
      %v318 = vmul.f32 %v314, 0.01
      %v319 = vmul.f32 %v315, 0.01
      %v320 = vmax.f32 %v312, %v316
      %v321 = vmax.f32 %v313, %v317
      %v322 = vmax.f32 %v314, %v318
      %v323 = vmax.f32 %v315, %v319
      %324 = vst [vmem:[%s199] sm:$0xff] %v320
      %325 = vst [vmem:[%s199 + $0x8] sm:$0xff] %v321
      %326 = vst [vmem:[%s199 + $0x10] sm:$0xff] %v322
      %327 = vst [vmem:[%s199 + $0x18] sm:$0xff] %v323
      %s328 = smul.u32 4, %s15
      %p329 = scmp.lt.s32.totalorder %s328, 11
      %s330 = scalar_select %p329, %s328, 11
      %s331 = smul.addr %s330, 8
      %s332 = scalar_lea.vmem %s4, %s331
      // Predicated region
      $region37: #{dense_block_forward.3} parent=35 // pred_check
        %p333 = pneg %p122
      $region38: #{dense_block_forward.3} parent=35 // pred_check_branch
        %335 = sbr.rel (%p333) target = $region40
      $region39: #{dense_block_forward.3} parent=35 // pred_region
        %s336 = smul.u32 4, %s15
      $region40: #{dense_block_forward.3} parent=35 // pred_fallthru
        _
    $region36: #{dense_block_forward.3} parent=5 // pred_fallthru
      _
    %p337 = scmp.le.s32.totalorder 2, %s10
    // Predicated region
    $region41: #{dense_block_forward.3} parent=5 // pred_check
      %p338 = pneg %p337
    $region42: #{dense_block_forward.3} parent=5 // pred_check_branch
      %340 = sbr.rel (%p338) target = $region44
    $region43: #{dense_block_forward.3} parent=5 // pred_region
      %s341 = ssub.s32 %s10, 2
      // Predicated region
      $region45: #{dense_block_forward.3} parent=43 // pred_check
        %p342 = pneg %p128
      $region46: #{dense_block_forward.3} parent=43 // pred_check_branch
        %344 = sbr.rel (%p342) target = $region48
      $region47: #{dense_block_forward.3} parent=43 // pred_region
        %s345 = smul.u32 4, %s16
        %p346 = scmp.lt.s32.totalorder %s345, 11
        %s347 = scalar_select %p346, %s345, 11
        %s348 = smul.addr %s347, 8
        %s349 = scalar_lea.vmem %s4, %s348
      $region48: #{dense_block_forward.3} parent=43 // pred_fallthru
        _
    $region44: #{dense_block_forward.3} parent=5 // pred_fallthru
      _
  $region6: #{dense_block_forward.3} parent=0 // loop_footer
    %s14 = sadd.s32 1, %s10
  $region7: #{dense_block_forward.3} parent=0 // loop_footer_branch
    %9 = sbr.rel target = $region3
  $region8: #{dense_block_forward.3} parent=0 // loop_exit
    _

</llo_original>
